<compile_context>
chip_gen: v7x
topology: tpu7x:2x2x1
jax: 0.10.0
libtpu: 0.0.40
codegen_flags: <defaults>
</compile_context>

<pallas_src>
import jax
import jax.numpy as jnp
from jax.experimental import pallas as pl
from jax.experimental.pallas import tpu as pltpu


_VPU_MAX_CS = 8  # at/below this, skip the MXU entirely (Cs^2 VPU FMAs / tile)


def _make_vpu_kernel(C, Cs, start):
    """1x1 conv over channels [start, start+Cs) as unrolled VPU FMAs."""

    def kernel(w_ref, b_ref, x_ref, o_ref):
        # w_ref: SMEM (Cs*Cs,) flattened (out, in); b_ref: SMEM (Cs,)
        # x_ref / o_ref: VMEM (1, C, TILE_HW)
        # Pass every channel through, then overwrite the sliced window.
        o_ref[...] = x_ref[...]
        xin = [
            x_ref[0, start + ci : start + ci + 1, :].astype(jnp.float32)
            for ci in range(Cs)
        ]  # Cs x (1, TILE_HW)
        for co in range(Cs):
            y = xin[0] * w_ref[co * Cs + 0]
            for ci in range(1, Cs):
                y = y + xin[ci] * w_ref[co * Cs + ci]
            y = y + b_ref[co]
            o_ref[0, start + co : start + co + 1, :] = y.astype(o_ref.dtype)

    return kernel


def _make_mxu_kernel(C, Cs, start):
    """1x1 conv over channels [start, start+Cs) as an MXU matmul."""
    stop = start + Cs

    def kernel(w_ref, b_ref, x_ref, o_ref):
        # w_ref: VMEM (Cs, Cs) (out, in); b_ref: VMEM (Cs, 1)
        o_ref[...] = x_ref[...]
        xwin = x_ref[0, start:stop, :]                        # (Cs, TILE_HW)
        y = jnp.dot(w_ref[...], xwin, preferred_element_type=jnp.float32)
        y = y + b_ref[...].astype(jnp.float32)
        o_ref[0, start:stop, :] = y.astype(o_ref.dtype)

    return kernel


def _pick_tile_hw(HW, C, itemsize, vmem_budget_bytes=24 * 1024 * 1024):
    """Largest lane tile fitting a double-buffered (in + out) VMEM budget."""
    per_lane = 2 * 2 * C * itemsize          # 2 buffers x (in + out) x C rows
    t = int(vmem_budget_bytes // max(per_lane, 1))
    t = min(t, 2048)                         # mem-bound sweet spot (512-2048)
    if HW <= t:
        return HW                            # block dim == full array dim: legal
    return max(128, (t // 128) * 128)        # lane-dense multiple of 128


def channel_slice_conv1x1(x, w, b, start=0, stop=None):
    """JAX/Pallas equivalent of ChannelSliceWrapper(Conv2d(Cs, Cs, 1), start, stop).

    x: (B, C, H, W)  NCHW, as in PyTorch.
    w: (Cs, Cs)      PyTorch Conv2d convention (out_channels, in_channels).
    b: (Cs,)
    """
    B, C, H, W = x.shape
    stop_ = C if stop is None else stop
    Cs = stop_ - start
    if Cs <= 0:
        return x
    assert w.shape == (Cs, Cs) and b.shape == (Cs,)

    HW = H * W
    x3 = x.reshape(B, C, HW)                 # free reshape, no transpose
    tile_hw = _pick_tile_hw(HW, C, jnp.dtype(x.dtype).itemsize)
    grid = (B, pl.cdiv(HW, tile_hw))         # ragged last tile masked by Pallas

    xio_spec = pl.BlockSpec((1, C, tile_hw), lambda bi, ti: (bi, 0, ti))

    if Cs <= _VPU_MAX_CS:
        kernel = _make_vpu_kernel(C, Cs, start)
        param_specs = [
            pl.BlockSpec(memory_space=pltpu.MemorySpace.SMEM),   # w (flattened)
            pl.BlockSpec(memory_space=pltpu.MemorySpace.SMEM),   # b
        ]
        params = (w.reshape(-1), b)
    else:
        kernel = _make_mxu_kernel(C, Cs, start)
        param_specs = [
            pl.BlockSpec((Cs, Cs), lambda bi, ti: (0, 0)),       # resident W
            pl.BlockSpec((Cs, 1), lambda bi, ti: (0, 0)),        # resident bias
        ]
        params = (w, b.reshape(Cs, 1))

    out3 = pl.pallas_call(
        kernel,
        out_shape=jax.ShapeDtypeStruct((B, C, HW), x.dtype),
        grid_spec=pltpu.PrefetchScalarGridSpec(
            num_scalar_prefetch=0,
            grid=grid,
            in_specs=param_specs + [xio_spec],
            out_specs=xio_spec,
        ),
        compiler_params=pltpu.CompilerParams(
            dimension_semantics=("parallel", "parallel"),
            vmem_limit_bytes=32 * 1024 * 1024,  # explicit: safe on v7x (64 MiB VMEM)
        ),
    )(*params, x3)
    # TODO(synk): for C >> Cs, a window-only out_spec + input_output_aliases
    # (write only channels [start, stop), alias x to the output) would cut HBM
    # traffic from 2*C to 2*Cs bytes per pixel; it needs non-block-aligned
    # channel offsets in the out index_map, so it is left out of this version.
    return out3.reshape(B, C, H, W)


def _reference(x, w, b, start, stop):
    xs = x[:, start:stop]
    ys = jnp.einsum(
        "oi,bihw->bohw", w, xs, precision=jax.lax.Precision.HIGHEST
    ) + b[None, :, None, None]
    return x.at[:, start:stop].set(ys.astype(x.dtype))


if __name__ == "__main__":
    key = jax.random.PRNGKey(0)
    k1, k2, k3, k4, k5, k6 = jax.random.split(key, 6)

    # --- Case 1: ChannelSliceWrapper demo shapes (small Cs -> VPU path) ---
    B, C, H, W = 2, 4, 16, 16
    start, stop = 1, 3
    Cs = stop - start
    x = jax.random.normal(k1, (B, C, H, W), dtype=jnp.float32)
    w = jax.random.normal(k2, (Cs, Cs), dtype=jnp.float32) * 0.1   # (out, in)
    b = jax.random.normal(k3, (Cs,), dtype=jnp.float32) * 0.1
    out = jax.block_until_ready(channel_slice_conv1x1(x, w, b, start, stop))
    ref = _reference(x, w, b, start, stop)
    assert jnp.allclose(out, ref, atol=1e-4, rtol=1e-4), "VPU path mismatch"
    assert jnp.array_equal(out[:, :start], x[:, :start])
    assert jnp.array_equal(out[:, stop:], x[:, stop:])

    # --- Case 2: larger slice exercises the MXU path ---
    B2, C2, H2, W2 = 1, 24, 8, 16
    start2, stop2 = 4, 20
    Cs2 = stop2 - start2
    x2 = jax.random.normal(k4, (B2, C2, H2, W2), dtype=jnp.float32)
    w2 = jax.random.normal(k5, (Cs2, Cs2), dtype=jnp.float32) * 0.1
    b2 = jax.random.normal(k6, (Cs2,), dtype=jnp.float32) * 0.1
    out2 = jax.block_until_ready(channel_slice_conv1x1(x2, w2, b2, start2, stop2))
    ref2 = _reference(x2, w2, b2, start2, stop2)
    assert jnp.allclose(out2, ref2, atol=3e-2, rtol=3e-2), "MXU path mismatch"
    assert jnp.array_equal(out2[:, :start2], x2[:, :start2])
    assert jnp.array_equal(out2[:, stop2:], x2[:, stop2:])

    print("KERNEL_OK")
</pallas_src>

<mosaic_0001>
module attributes {stable_mosaic.version = 11 : i64} {
  func.func @kernel(%arg0: i32, %arg1: i32, %arg2: memref<4xf32, #tpu.memory_space<smem>>, %arg3: memref<2xf32, #tpu.memory_space<smem>>, %arg4: memref<1x4x256xf32, #tpu.memory_space<vmem>>, %arg5: memref<1x4x256xf32, #tpu.memory_space<vmem>>) attributes {dimension_semantics = [#tpu.dimension_semantics<parallel>, #tpu.dimension_semantics<parallel>], iteration_bounds = array<i64: 2, 1>, scalar_prefetch = 0 : i64, scratch_operands = 0 : i64, tpu.core_type = #tpu.core_type<tc>, window_params = [{transform_indices = @transform_0, window_bounds = array<i64: 4>}, {transform_indices = @transform_1, window_bounds = array<i64: 2>}, {transform_indices = @transform_2, window_bounds = array<i64: 1, 4, 256>}, {transform_indices = @transform_3, window_bounds = array<i64: 1, 4, 256>}]} {
    %c0 = arith.constant 0 : index
    %c0_0 = arith.constant 0 : index
    %c0_1 = arith.constant 0 : index
    %0 = vector.load %arg4[%c0, %c0_0, %c0_1] : memref<1x4x256xf32, #tpu.memory_space<vmem>>, vector<1x4x256xf32>
    %c0_2 = arith.constant 0 : index
    %c0_3 = arith.constant 0 : index
    %c0_4 = arith.constant 0 : index
    %1 = vector.load %arg5[%c0_2, %c0_3, %c0_4] : memref<1x4x256xf32, #tpu.memory_space<vmem>>, vector<1x4x256xf32>
    tpu.vector_store %arg5[%c0_2, %c0_3, %c0_4], %0 {strides = array<i32>} : memref<1x4x256xf32, #tpu.memory_space<vmem>>, vector<1x4x256xf32>,
    %c0_5 = arith.constant 0 : index
    %c1 = arith.constant 1 : index
    %c0_6 = arith.constant 0 : index
    %2 = vector.load %arg4[%c0_5, %c1, %c0_6] : memref<1x4x256xf32, #tpu.memory_space<vmem>>, vector<1x1x256xf32>
    %3 = vector.shape_cast %2 : vector<1x1x256xf32> to vector<1x256xf32>
    %c0_7 = arith.constant 0 : index
    %c2 = arith.constant 2 : index
    %c0_8 = arith.constant 0 : index
    %4 = vector.load %arg4[%c0_7, %c2, %c0_8] : memref<1x4x256xf32, #tpu.memory_space<vmem>>, vector<1x1x256xf32>
    %5 = vector.shape_cast %4 : vector<1x1x256xf32> to vector<1x256xf32>
    %c0_9 = arith.constant 0 : index
    %6 = memref.load %arg2[%c0_9] : memref<4xf32, #tpu.memory_space<smem>>
    %7 = vector.broadcast %6 : f32 to vector<1x256xf32>
    %8 = arith.mulf %3, %7 : vector<1x256xf32>
    %c1_10 = arith.constant 1 : index
    %9 = memref.load %arg2[%c1_10] : memref<4xf32, #tpu.memory_space<smem>>
    %10 = vector.broadcast %9 : f32 to vector<1x256xf32>
    %11 = arith.mulf %5, %10 : vector<1x256xf32>
    %12 = arith.addf %8, %11 : vector<1x256xf32>
    %c0_11 = arith.constant 0 : index
    %13 = memref.load %arg3[%c0_11] : memref<2xf32, #tpu.memory_space<smem>>
    %14 = vector.broadcast %13 : f32 to vector<1x256xf32>
    %15 = arith.addf %12, %14 : vector<1x256xf32>
    %c0_12 = arith.constant 0 : index
    %c1_13 = arith.constant 1 : index
    %c0_14 = arith.constant 0 : index
    %16 = vector.load %arg5[%c0_12, %c1_13, %c0_14] : memref<1x4x256xf32, #tpu.memory_space<vmem>>, vector<1x1x256xf32>
    %17 = vector.shape_cast %16 : vector<1x1x256xf32> to vector<1x256xf32>
    %18 = vector.shape_cast %15 : vector<1x256xf32> to vector<1x1x256xf32>
    tpu.vector_store %arg5[%c0_12, %c1_13, %c0_14], %18 {strides = array<i32>} : memref<1x4x256xf32, #tpu.memory_space<vmem>>, vector<1x1x256xf32>,
    %c2_15 = arith.constant 2 : index
    %19 = memref.load %arg2[%c2_15] : memref<4xf32, #tpu.memory_space<smem>>
    %20 = vector.broadcast %19 : f32 to vector<1x256xf32>
    %21 = arith.mulf %3, %20 : vector<1x256xf32>
    %c3 = arith.constant 3 : index
    %22 = memref.load %arg2[%c3] : memref<4xf32, #tpu.memory_space<smem>>
    %23 = vector.broadcast %22 : f32 to vector<1x256xf32>
    %24 = arith.mulf %5, %23 : vector<1x256xf32>
    %25 = arith.addf %21, %24 : vector<1x256xf32>
    %c1_16 = arith.constant 1 : index
    %26 = memref.load %arg3[%c1_16] : memref<2xf32, #tpu.memory_space<smem>>
    %27 = vector.broadcast %26 : f32 to vector<1x256xf32>
    %28 = arith.addf %25, %27 : vector<1x256xf32>
    %c0_17 = arith.constant 0 : index
    %c2_18 = arith.constant 2 : index
    %c0_19 = arith.constant 0 : index
    %29 = vector.load %arg5[%c0_17, %c2_18, %c0_19] : memref<1x4x256xf32, #tpu.memory_space<vmem>>, vector<1x1x256xf32>
    %30 = vector.shape_cast %29 : vector<1x1x256xf32> to vector<1x256xf32>
    %31 = vector.shape_cast %28 : vector<1x256xf32> to vector<1x1x256xf32>
    tpu.vector_store %arg5[%c0_17, %c2_18, %c0_19], %31 {strides = array<i32>} : memref<1x4x256xf32, #tpu.memory_space<vmem>>, vector<1x1x256xf32>,
    return
  }
  func.func @transform_0(%arg0: i32, %arg1: i32) -> i32 {
    %c0_i32 = arith.constant 0 : i32
    %c0_i32_0 = arith.constant 0 : i32
    return %c0_i32 : i32
  }
  func.func @transform_1(%arg0: i32, %arg1: i32) -> i32 {
    %c0_i32 = arith.constant 0 : i32
    %c0_i32_0 = arith.constant 0 : i32
    return %c0_i32 : i32
  }
  func.func @transform_2(%arg0: i32, %arg1: i32) -> (i32, i32, i32) {
    %c0_i32 = arith.constant 0 : i32
    %c0_i32_0 = arith.constant 0 : i32
    return %arg0, %c0_i32, %arg1 : i32, i32, i32
  }
  func.func @transform_3(%arg0: i32, %arg1: i32) -> (i32, i32, i32) {
    %c0_i32 = arith.constant 0 : i32
    %c0_i32_0 = arith.constant 0 : i32
    return %arg0, %c0_i32, %arg1 : i32, i32, i32
  }
}

</mosaic_0001>

<llo_original>
// kernel: tpu_custom_call.1
$region0: #{tpu_custom_call.1}
  #allocation0 [shape = 'u32[]', space=smem, size = 0x4, offset = 0x4, fixed_abs, tag = 'smem constant byte address 0x4 - core index']
  #allocation1 [shape = 'u32[144,128]{1,0:T(1,128)}', space=vmem, size = 0x12000, scoped, tag = 'internal scratch']
  %s0 = inlined_call_operand.hbm [shape: f32[4], index: 0, kind: input, shape index: {}]
  %s1 = inlined_call_operand.vmem [shape: f32[2], index: 1, kind: input, shape index: {}]
  %s2 = inlined_call_operand.hbm [shape: f32[2,4,256], index: 2, kind: input, shape index: {}]
  %s3 = inlined_call_operand.hbm [shape: f32[2,4,256], index: 3, kind: output, shape index: {}]
  %s4 = sld [smem:[#allocation0]]
  $region57: #{tpu_custom_call.1} parent=0
    _
  %s6 = ssub.s32 1, %s4
  %s7 = scalar_select 0, %s6, %s4
  $region1: #{tpu_custom_call.1} parent=0
    #allocation2 [shape = 'u8[512]{0}', space=smem, size = 0x200, scoped, tag = 'input window, operand 0, single buffered']
    #allocation3 [shape = 's32[2]{0}', space=sflag, size = 0x8, scoped, tag = 'scoped memory for tpu_custom_call.1']
    #allocation4 [shape = 's32[2]{0}', space=sflag, size = 0x8, scoped, tag = 'scoped memory for tpu_custom_call.1']
    #allocation5 [shape = 's32[2]{0}', space=sflag, size = 0x8, scoped, tag = 'scoped memory for tpu_custom_call.1']
    #allocation6 [shape = 's32[2]{0}', space=sflag, size = 0x8, scoped, tag = 'scoped memory for tpu_custom_call.1']
    #allocation7 [shape = 'u8[512]{0}', space=smem, size = 0x200, scoped, tag = 'input window, operand 1, single buffered']
    #allocation8 [shape = 'u8[8192]{0}', space=vmem, size = 0x2000, scoped, tag = 'input window, operand 2']
    #allocation9 [shape = 'u8[8192]{0}', space=vmem, size = 0x2000, scoped, tag = 'output window, operand 0']
    %8 = vsyncpa [#allocation5], 0
    %9 = vsyncpa [#allocation6], 0
    %10 = vsyncpa [#allocation3], 0
    %s11 = scalar_lea.sflag [#allocation3], 1
    %12 = vsyncpa %s11, 0
    %13 = vsyncpa [#allocation4], 0
    %s14 = scalar_lea.sflag [#allocation4], 1
    %15 = vsyncpa %s14, 0
    loop: start=0, step=1, limit=4
    $region2: #{tpu_custom_call.1} parent=1 // loop_pre_header
      _
    $region3: #{tpu_custom_call.1} parent=1 // loop_header
      %s17 = sphi 0, %s21
      %p18 = scmp.ge.s32.totalorder %s17, 4
      %s24 = sphi 0, %s36
      %s25 = sphi 0, %s32
      %s26 = sphi 0, %s24
      %s27 = sphi 0, %s25
      %s28 = sphi 0, %s26
      %s29 = sphi 0, %s27
      %s37 = sphi 0, %s37
      %s39 = sphi 0, %s37
      %s40 = sphi 0, %s39
      %s54 = sphi 0, %s40
      %s58 = sphi 0, %s58
      %s60 = sphi 0, %s58
      %s61 = sphi 0, %s60
      %s75 = sphi 0, %s61
      %s83 = sphi 0, %s85
      %s86 = sphi 0, %s83
      %s87 = sphi 0, %s86
      %s103 = sphi 0, %s87
      %s111 = sphi 0, %s113
      %s114 = sphi 0, %s111
      %s115 = sphi 0, %s114
      %s131 = sphi 0, %s115
    $region4: #{tpu_custom_call.1} parent=1 // loop_header_branch
      %20 = sbr.rel (%p18) target = $region8
    $region5: #{tpu_custom_call.1} parent=1 // loop_body
      %s22 = ssub.s32 %s17, 1
      %s23 = ssub.s32 %s17, 2
      %s30 = sadd.s32 1, %s25
      %p31 = scmp.ge.s32.totalorder %s30, 1
      %s32 = scalar_select %p31, 0, %s30
      %s33 = sadd.s32 1, %s24
      %s34 = scalar_select %p31, %s33, %s24
      %p35 = scmp.ge.s32.totalorder %s34, 2
      %s36 = scalar_select %p35, 0, %s34
      %s38 = sadd.s32 %s37, 1
      %p41 = scmp.eq.s32.totalorder %s17, 1
      %p42 = scmp.ne.s32.totalorder %s37, %s39
      %p43 = scmp.eq.s32.totalorder %s17, 0
      %p44 = por %p42, %p43
      %p45 = scmp.ne.s32.totalorder %s37, %s39
      %p46 = scmp.eq.s32.totalorder %s22, 1
      %p47 = por %p45, %p46
      %p48 = scmp.ne.s32.totalorder %s39, %s40
      %p49 = scmp.eq.s32.totalorder %s22, 0
      %p50 = por %p48, %p49
      %p51 = scmp.ne.s32.totalorder %s39, %s40
      %p52 = scmp.eq.s32.totalorder %s23, 1
      %p53 = por %p51, %p52
      %p55 = scmp.ne.s32.totalorder %s40, %s54
      %p56 = scmp.eq.s32.totalorder %s23, 0
      %p57 = por %p55, %p56
      %s59 = sadd.s32 %s58, 1
      %p62 = scmp.eq.s32.totalorder %s17, 1
      %p63 = scmp.ne.s32.totalorder %s58, %s60
      %p64 = scmp.eq.s32.totalorder %s17, 0
      %p65 = por %p63, %p64
      %p66 = scmp.ne.s32.totalorder %s58, %s60
      %p67 = scmp.eq.s32.totalorder %s22, 1
      %p68 = por %p66, %p67
      %p69 = scmp.ne.s32.totalorder %s60, %s61
      %p70 = scmp.eq.s32.totalorder %s22, 0
      %p71 = por %p69, %p70
      %p72 = scmp.ne.s32.totalorder %s60, %s61
      %p73 = scmp.eq.s32.totalorder %s23, 1
      %p74 = por %p72, %p73
      %p76 = scmp.ne.s32.totalorder %s61, %s75
      %p77 = scmp.eq.s32.totalorder %s23, 0
      %p78 = por %p76, %p77
      %s79 = ssub.s32 %s24, %s36
      %s80 = ssub.s32 %s25, %s32
      %s81 = sor.u32 %s79, %s80
      %p82 = scmp.eq.s32.totalorder %s81, 0
      %s84 = sadd.s32 %s83, 1
      %s85 = scalar_select %p82, %s83, %s84
      %p88 = pneg %p82
      %p89 = scmp.eq.s32.totalorder %s17, 1
      %p90 = por %p88, %p89
      %p91 = scmp.ne.s32.totalorder %s83, %s86
      %p92 = scmp.eq.s32.totalorder %s17, 0
      %p93 = por %p91, %p92
      %p94 = scmp.ne.s32.totalorder %s83, %s86
      %p95 = scmp.eq.s32.totalorder %s22, 1
      %p96 = por %p94, %p95
      %p97 = scmp.ne.s32.totalorder %s86, %s87
      %p98 = scmp.eq.s32.totalorder %s22, 0
      %p99 = por %p97, %p98
      %p100 = scmp.ne.s32.totalorder %s86, %s87
      %p101 = scmp.eq.s32.totalorder %s23, 1
      %p102 = por %p100, %p101
      %p104 = scmp.ne.s32.totalorder %s87, %s103
      %p105 = scmp.eq.s32.totalorder %s23, 0
      %p106 = por %p104, %p105
      %s107 = ssub.s32 %s24, %s36
      %s108 = ssub.s32 %s25, %s32
      %s109 = sor.u32 %s107, %s108
      %p110 = scmp.eq.s32.totalorder %s109, 0
      %s112 = sadd.s32 %s111, 1
      %s113 = scalar_select %p110, %s111, %s112
      %p116 = pneg %p110
      %p117 = scmp.eq.s32.totalorder %s17, 1
      %p118 = por %p116, %p117
      %p119 = scmp.ne.s32.totalorder %s111, %s114
      %p120 = scmp.eq.s32.totalorder %s17, 0
      %p121 = por %p119, %p120
      %p122 = scmp.ne.s32.totalorder %s111, %s114
      %p123 = scmp.eq.s32.totalorder %s22, 1
      %p124 = por %p122, %p123
      %p125 = scmp.ne.s32.totalorder %s114, %s115
      %p126 = scmp.eq.s32.totalorder %s22, 0
      %p127 = por %p125, %p126
      %p128 = scmp.ne.s32.totalorder %s114, %s115
      %p129 = scmp.eq.s32.totalorder %s23, 1
      %p130 = por %p128, %p129
      %p132 = scmp.ne.s32.totalorder %s115, %s131
      %p133 = scmp.eq.s32.totalorder %s23, 0
      %p134 = por %p132, %p133
      %p135 = scmp.le.s32.totalorder 1, %s17
      %p136 = scmp.lt.s32.totalorder %s17, 3
      %p137 = pnand %p135, %p136
      %p138 = pneg %p137
      // Predicated region
      $region9: #{tpu_custom_call.1} parent=5 // pred_check
        _
      $region10: #{tpu_custom_call.1} parent=5 // pred_check_branch
        %140 = sbr.rel (%p137) target = $region12
      $region11: #{tpu_custom_call.1} parent=5 // pred_region
        %s141 = ssub.s32 %s17, 1
        // Predicated region
        $region13: #{tpu_custom_call.1} parent=11 // pred_check
          %p142 = pneg %p50
        $region14: #{tpu_custom_call.1} parent=11 // pred_check_branch
          %144 = sbr.rel (%p142) target = $region16
        $region15: #{tpu_custom_call.1} parent=11 // pred_region
          %s146 = ssub.s32 16, 16
          %147 = vsyncadd [#allocation5], %s146
          %150 = dma.hbm_to_smem %s0, 16, [#allocation2], [#allocation5]
        $region16: #{tpu_custom_call.1} parent=11 // pred_fallthru
          _
        // Predicated region
        $region17: #{tpu_custom_call.1} parent=11 // pred_check
          %p151 = pneg %p71
        $region18: #{tpu_custom_call.1} parent=11 // pred_check_branch
          %153 = sbr.rel (%p151) target = $region20
        $region19: #{tpu_custom_call.1} parent=11 // pred_region
          %s155 = ssub.s32 16, 16
          %156 = vsyncadd [#allocation6], %s155
          %s158 = sshll.u32 %s1, 4
          %s159 = int_to_ptr.vmem [resolvable:$true] %s158
          %161 = dma.vmem_to_smem %s159, 16, [#allocation7], [#allocation6]
        $region20: #{tpu_custom_call.1} parent=11 // pred_fallthru
          _
      $region12: #{tpu_custom_call.1} parent=5 // pred_fallthru
        _
      %p162 = scmp.lt.s32.totalorder %s17, 2
      // Predicated region
      $region21: #{tpu_custom_call.1} parent=5 // pred_check
        %p163 = pneg %p162
      $region22: #{tpu_custom_call.1} parent=5 // pred_check_branch
        %165 = sbr.rel (%p163) target = $region24
      $region23: #{tpu_custom_call.1} parent=5 // pred_region
        // Predicated region
        $region25: #{tpu_custom_call.1} parent=23 // pred_check
          %p166 = pneg %p93
        $region26: #{tpu_custom_call.1} parent=23 // pred_check_branch
          %168 = sbr.rel (%p166) target = $region28
        $region27: #{tpu_custom_call.1} parent=23 // pred_region
          %s169 = sand.u32 %s83, 1
          %s170 = scalar_lea.sflag [#allocation3], %s169
          %s171 = sand.u32 %s83, 1
          %s172 = smul.addr %s171, 8
          %s173 = scalar_lea.vmem [#allocation8], %s172
          %s174 = smul.u32 2, %s25
          %s176 = ssub.s32 128, 128
          %177 = vsyncadd %s170, %s176
          %s178 = smul.addr %s24, 2
          %s179 = sadd.s32 %s174, %s178
          %s180 = smul.addr %s179, 64
          %s181 = scalar_lea.hbm %s2, %s180
          %s183 = sshll.u32 %s173, 4
          %s184 = int_to_ptr.vmem [resolvable:$true] %s183
          %186 = dma.hbm_to_vmem [thread:$0]  %s181, 128, %s184, %s170
        $region28: #{tpu_custom_call.1} parent=23 // pred_fallthru
          _
      $region24: #{tpu_custom_call.1} parent=5 // pred_fallthru
        _
      %p187 = scmp.le.s32.totalorder 1, %s17
      %p188 = scmp.lt.s32.totalorder %s17, 3
      %p189 = pnand %p187, %p188
      %p190 = pneg %p189
      // Predicated region
      $region29: #{tpu_custom_call.1} parent=5 // pred_check
        _
      $region30: #{tpu_custom_call.1} parent=5 // pred_check_branch
        %192 = sbr.rel (%p189) target = $region32
      $region31: #{tpu_custom_call.1} parent=5 // pred_region
        %s193 = ssub.s32 %s17, 1
        // Predicated region
        $region33: #{tpu_custom_call.1} parent=31 // pred_check
          %p194 = pneg %p50
        $region34: #{tpu_custom_call.1} parent=31 // pred_check_branch
          %196 = sbr.rel (%p194) target = $region36
        $region35: #{tpu_custom_call.1} parent=31 // pred_region
          %197 = dma.done [#allocation5], 16
        $region36: #{tpu_custom_call.1} parent=31 // pred_fallthru
          _
        // Predicated region
        $region37: #{tpu_custom_call.1} parent=31 // pred_check
          %p198 = pneg %p71
        $region38: #{tpu_custom_call.1} parent=31 // pred_check_branch
          %200 = sbr.rel (%p198) target = $region40
        $region39: #{tpu_custom_call.1} parent=31 // pred_region
          %201 = dma.done [#allocation6], 16
        $region40: #{tpu_custom_call.1} parent=31 // pred_fallthru
          _
        %s202 = sand.u32 %s86, 1
        %s203 = scalar_lea.sflag [#allocation3], %s202
        %s204 = sand.u32 %s86, 1
        %s205 = smul.addr %s204, 8
        %s206 = scalar_lea.vmem [#allocation8], %s205
        // Predicated region
        $region41: #{tpu_custom_call.1} parent=31 // pred_check
          %p207 = pneg %p99
        $region42: #{tpu_custom_call.1} parent=31 // pred_check_branch
          %209 = sbr.rel (%p207) target = $region44
        $region43: #{tpu_custom_call.1} parent=31 // pred_region
          %210 = dma.done %s203, 128
        $region44: #{tpu_custom_call.1} parent=31 // pred_fallthru
          _
        %211 = sfence
        %p212 = pneg %p50
        %p213 = pneg %p47
        %p214 = pneg %p71
        %p215 = pneg %p68
        %s216 = sand.u32 %s86, 1
        %s217 = scalar_lea.sflag [#allocation3], %s216
        %s218 = sand.u32 %s86, 1
        %s219 = smul.addr %s218, 8
        %s220 = scalar_lea.vmem [#allocation8], %s219
        %p221 = pneg %p99
        %p222 = pneg %p96
        %p223 = pneg %p127
        %p224 = pneg %p124
        %s225 = sand.u32 %s114, 1
        %s226 = scalar_lea.sflag [#allocation4], %s225
        %s227 = sand.u32 %s114, 1
        %s228 = smul.addr %s227, 8
        %s229 = scalar_lea.vmem [#allocation9], %s228
        %s230 = smul.u32 2, %s27
        %s231 = smul.u32 2, %s27
        %v232 = vld [vmem:[%s206] sm:$0xff]
        %233 = vst [vmem:[%s229] sm:$0xff] %v232
        %s234 = scalar_lea.vmem %s206, 1 [#allocation8]
        %v235 = vld [vmem:[%s234] ss:$4 sm:$0x3]
        %s236 = scalar_lea.vmem %s206, 2 [#allocation8]
        %v237 = vld [vmem:[%s236] ss:$4 sm:$0x3]
        %s238 = sld [smem:[#allocation2]]
        %v239 = vstv %s238
        %v240 = vmul.f32 %v235, %v239
        %s241 = sld [smem:[#allocation2 + $0x1]]
        %v242 = vstv %s241
        %v243 = vmul.f32 %v237, %v242
        %v244 = vadd.f32 %v240, %v243
        %s245 = sld [smem:[#allocation7]]
        %v246 = vstv %s245
        %v247 = vadd.f32 %v244, %v246
        %v248 = vlaneseq
        %vm249 = vcmp.ge.s32.totalorder %v248, 0
        %vm250 = vcmp.lt.s32.totalorder %v248, 256
        %vm251 = vmand %vm249, %vm250
        %s252 = scalar_lea.vmem %s229, 1 [#allocation9]
        %253 = vst.msk [vmem:[%s252] ss:$4 sm:$0x3] %vm251, %v247
        %s254 = sld [smem:[#allocation2 + $0x2]]
        %v255 = vstv %s254
        %v256 = vmul.f32 %v235, %v255
        %s257 = sld [smem:[#allocation2 + $0x3]]
        %v258 = vstv %s257
        %v259 = vmul.f32 %v237, %v258
        %v260 = vadd.f32 %v256, %v259
        %s261 = sld [smem:[#allocation7 + $0x1]]
        %v262 = vstv %s261
        %v263 = vadd.f32 %v260, %v262
        %s264 = scalar_lea.vmem %s229, 2 [#allocation9]
        %265 = vst.msk [vmem:[%s264] ss:$4 sm:$0x3] %vm251, %v263
        %s266 = sand.u32 %s114, 1
        %s267 = scalar_lea.sflag [#allocation4], %s266
        %s268 = sand.u32 %s114, 1
        %s269 = smul.addr %s268, 8
        %s270 = scalar_lea.vmem [#allocation9], %s269
        // Predicated region
        $region45: #{tpu_custom_call.1} parent=31 // pred_check
          %p271 = pneg %p124
        $region46: #{tpu_custom_call.1} parent=31 // pred_check_branch
          %273 = sbr.rel (%p271) target = $region48
        $region47: #{tpu_custom_call.1} parent=31 // pred_region
          %s274 = smul.u32 2, %s27
          %s276 = ssub.s32 128, 128
          %277 = vsyncadd %s267, %s276
          %s278 = smul.addr %s26, 2
          %s279 = sadd.s32 %s274, %s278
          %s280 = smul.addr %s279, 64
          %s281 = scalar_lea.hbm %s3, %s280
          %s283 = sshll.u32 %s270, 4
          %s284 = int_to_ptr.vmem [resolvable:$true] %s283
          %286 = dma.vmem_to_hbm [thread:$0]  %s284, 128, %s281, %s267
        $region48: #{tpu_custom_call.1} parent=31 // pred_fallthru
          _
      $region32: #{tpu_custom_call.1} parent=5 // pred_fallthru
        _
      %p287 = scmp.le.s32.totalorder 2, %s17
      // Predicated region
      $region49: #{tpu_custom_call.1} parent=5 // pred_check
        %p288 = pneg %p287
      $region50: #{tpu_custom_call.1} parent=5 // pred_check_branch
        %290 = sbr.rel (%p288) target = $region52
      $region51: #{tpu_custom_call.1} parent=5 // pred_region
        %s291 = ssub.s32 %s17, 2
        // Predicated region
        $region53: #{tpu_custom_call.1} parent=51 // pred_check
          %p292 = pneg %p130
        $region54: #{tpu_custom_call.1} parent=51 // pred_check_branch
          %294 = sbr.rel (%p292) target = $region56
        $region55: #{tpu_custom_call.1} parent=51 // pred_region
          %s295 = sand.u32 %s115, 1
          %s296 = scalar_lea.sflag [#allocation4], %s295
          %s297 = sand.u32 %s115, 1
          %s298 = smul.addr %s297, 8
          %s299 = scalar_lea.vmem [#allocation9], %s298
          %300 = dma.done %s296, 128
        $region56: #{tpu_custom_call.1} parent=51 // pred_fallthru
          _
      $region52: #{tpu_custom_call.1} parent=5 // pred_fallthru
        _
    $region6: #{tpu_custom_call.1} parent=1 // loop_footer
      %s21 = sadd.s32 1, %s17
    $region7: #{tpu_custom_call.1} parent=1 // loop_footer_branch
      %16 = sbr.rel target = $region3
    $region8: #{tpu_custom_call.1} parent=1 // loop_exit
      _
    %301 = vsyncpa [#allocation3], 1
    %s302 = scalar_lea.sflag [#allocation3], 1
    %303 = vsyncpa %s302, 1
    %304 = vsyncpa [#allocation4], 1
    %s305 = scalar_lea.sflag [#allocation4], 1
    %306 = vsyncpa %s305, 1
    %307 = vsyncpa [#allocation5], 1
    %s308 = scalar_lea.sflag [#allocation5], 1
    %309 = vsyncpa %s308, 1
    %310 = vsyncpa [#allocation6], 1
    %s311 = scalar_lea.sflag [#allocation6], 1
    %312 = vsyncpa %s311, 1

</llo_original>
